<compile_context>
chip_gen: v6e
topology: v6e:2x2x1
jax: 0.10.0
libtpu: 0.0.40
codegen_flags: <defaults>
</compile_context>

<pallas_src>
import functools

import jax
import jax.numpy as jnp
from jax.experimental import pallas as pl
from jax.experimental.pallas import tpu as pltpu


def _cross_entropy_kernel(x_ref, t_ref, out_ref, *, batch):
    """One batch tile -> one independent partial sum of per-sample NLL.

    x_ref  : (TB, C)      logits tile (native dtype; widened to f32 in-kernel)
    t_ref  : (TB, 1)      int32 target class indices for this tile
    out_ref: (1, 8, 128)  f32 per-tile partial-sum block (value broadcast)
    """
    i = pl.program_id(0)
    tb = x_ref.shape[0]

    x = x_ref[...]                                                   # (TB, C)
    t = t_ref[...]                                                   # (TB, 1)

    # Target logit via one-hot select on the NATIVE tile. All non-selected
    # addends are exactly zero, so the row-sum is exact in any dtype; the
    # f32 copy below is only needed for the logsumexp path.
    cls_idx = jax.lax.broadcasted_iota(jnp.int32, x.shape, 1)        # (TB, C)
    tgt = jnp.sum(jnp.where(cls_idx == t, x, jnp.zeros_like(x)),
                  axis=-1, keepdims=True).astype(jnp.float32)        # (TB, 1)

    xf = x.astype(jnp.float32)                                       # (TB, C)
    m = jnp.max(xf, axis=-1, keepdims=True)                          # (TB, 1)
    sum_exp = jnp.sum(jnp.exp(xf - m), axis=-1, keepdims=True)       # (TB, 1)

    per_sample = jnp.log(sum_exp) + m - tgt        # logsumexp(x) - x_t

    # Mask padded rows of the (possibly partial) last tile.
    row = jax.lax.broadcasted_iota(jnp.int32, per_sample.shape, 0) + i * tb
    per_sample = jnp.where(row < batch, per_sample, 0.0)

    partial = jnp.sum(per_sample)                                    # scalar
    out_ref[...] = jnp.broadcast_to(partial, out_ref.shape)


def _vmem_capacity_bytes() -> int:
    """Physical VMEM per TensorCore; conservative 64 MiB fallback (v7x)."""
    try:
        cap = getattr(pltpu.get_tpu_info(), "vmem_capacity_bytes", None)
        if cap:
            return int(cap)
    except Exception:
        pass
    return 64 * 1024 * 1024


def _pick_batch_tile(batch: int, num_classes: int, itemsize: int,
                     vmem_limit: int) -> int:
    """Largest batch tile whose true footprint fits the VMEM budget.

    Footprint per row ~= 2 * C * itemsize   (double-buffered native logits)
                       + 2 * C * 4          (live f32 widened copy + exp/shift)
                       + small               (targets, output block)
    """
    usable = max(8 * 1024 * 1024, vmem_limit - 8 * 1024 * 1024)
    per_row = num_classes * (2 * itemsize + 2 * 4) + 16
    tb = usable // per_row
    tb = max(8, min(8192, int(tb)))          # bytes-driven, not row-capped low
    tb = (tb // 8) * 8                       # (8,128) sublane rule
    b_pad8 = ((batch + 7) // 8) * 8
    return max(8, min(tb, b_pad8))


def cross_entropy(inputs: jax.Array, targets: jax.Array,
                  block_batch: int | None = None) -> jax.Array:
    """Mean cross-entropy loss, matching F.cross_entropy(inputs, targets)."""
    assert inputs.ndim == 2, "inputs must be (batch, num_classes)"
    assert targets.ndim == 1 and targets.shape[0] == inputs.shape[0]

    batch, num_classes = inputs.shape
    itemsize = jnp.dtype(inputs.dtype).itemsize

    vmem_cap = _vmem_capacity_bytes()
    # <= physical minus headroom; ~56 MiB on v7x, ~100 MiB on v5e/v6e.
    vmem_limit = max(32 * 1024 * 1024,
                     min(vmem_cap - 8 * 1024 * 1024, 100 * 1024 * 1024))

    tb = block_batch if block_batch is not None else _pick_batch_tile(
        batch, num_classes, itemsize, vmem_limit)
    assert tb % 8 == 0, "batch tile must be a multiple of 8"

    num_tiles = pl.cdiv(batch, tb)
    b_pad = num_tiles * tb

    x = inputs
    t = targets.astype(jnp.int32)
    if b_pad != batch:
        x = jnp.pad(x, ((0, b_pad - batch), (0, 0)))
        t = jnp.pad(t, (0, b_pad - batch))
    t2 = t.reshape(b_pad, 1)

    kernel = functools.partial(_cross_entropy_kernel, batch=batch)

    partials = pl.pallas_call(
        kernel,
        out_shape=jax.ShapeDtypeStruct((num_tiles, 8, 128), jnp.float32),
        grid=(num_tiles,),
        in_specs=[
            pl.BlockSpec((tb, num_classes), lambda i: (i, 0)),   # logits stream
            pl.BlockSpec((tb, 1), lambda i: (i, 0)),             # targets
        ],
        # One independent lane-dense block per tile -> grid axis is parallel
        # (shardable across v7x's two TensorCores).
        out_specs=pl.BlockSpec((1, 8, 128), lambda i: (i, 0, 0)),
        compiler_params=pltpu.CompilerParams(
            dimension_semantics=("parallel",),
            vmem_limit_bytes=int(vmem_limit),
        ),
        cost_estimate=pl.CostEstimate(
            flops=6 * batch * num_classes,
            transcendentals=batch * num_classes,
            bytes_accessed=batch * num_classes * itemsize + batch * 4,
        ),
    )(x, t2)

    return jnp.sum(partials[:, 0, 0]) / jnp.float32(batch)


def _reference_cross_entropy(inputs, targets):
    x = inputs.astype(jnp.float32)
    logp = jax.nn.log_softmax(x, axis=-1)
    nll = -jnp.take_along_axis(logp, targets[:, None].astype(jnp.int32),
                               axis=-1)[:, 0]
    return jnp.mean(nll)


if __name__ == "__main__":
    key = jax.random.PRNGKey(0)
    k1, k2, k3, k4, k5, k6 = jax.random.split(key, 6)

    # Test 1: small, single tile, auto tile size.
    batch, num_classes = 8, 32
    logits = jax.random.normal(k1, (batch, num_classes), dtype=jnp.float32)
    targets = jax.random.randint(k2, (batch,), 0, num_classes, dtype=jnp.int32)
    loss = jax.block_until_ready(cross_entropy(logits, targets))
    ref = _reference_cross_entropy(logits, targets)
    assert jnp.allclose(loss, ref, atol=1e-5, rtol=1e-5), (loss, ref)

    # Test 2: multiple tiles + padded last tile (exercises masking path).
    batch2, num_classes2 = 52, 40
    logits2 = jax.random.normal(k3, (batch2, num_classes2), dtype=jnp.float32)
    targets2 = jax.random.randint(k4, (batch2,), 0, num_classes2,
                                  dtype=jnp.int32)
    loss2 = jax.block_until_ready(cross_entropy(logits2, targets2,
                                                block_batch=16))
    ref2 = _reference_cross_entropy(logits2, targets2)
    assert jnp.allclose(loss2, ref2, atol=1e-5, rtol=1e-5), (loss2, ref2)

    # Test 3: bf16 logits, multiple tiles (exercises native-dtype gather path).
    batch3, num_classes3 = 24, 128
    logits3 = jax.random.normal(k5, (batch3, num_classes3),
                                dtype=jnp.float32).astype(jnp.bfloat16)
    targets3 = jax.random.randint(k6, (batch3,), 0, num_classes3,
                                  dtype=jnp.int32)
    loss3 = jax.block_until_ready(cross_entropy(logits3, targets3,
                                                block_batch=8))
    ref3 = _reference_cross_entropy(logits3, targets3)
    assert jnp.allclose(loss3, ref3, atol=1e-3, rtol=1e-3), (loss3, ref3)

    print("KERNEL_OK")
</pallas_src>

<mosaic_0001>
module attributes {stable_mosaic.version = 11 : i64} {
  func.func @_cross_entropy_kernel(%arg0: i32, %arg1: memref<8x32xf32, #tpu.memory_space<vmem>>, %arg2: memref<8x1xi32, #tpu.memory_space<vmem>>, %arg3: memref<1x8x128xf32, #tpu.memory_space<vmem>>) attributes {dimension_semantics = [#tpu.dimension_semantics<parallel>], iteration_bounds = array<i64: 1>, scalar_prefetch = 0 : i64, scratch_operands = 0 : i64, tpu.core_type = #tpu.core_type<tc>, window_params = [{transform_indices = @transform_0, window_bounds = array<i64: 8, 32>}, {transform_indices = @transform_1, window_bounds = array<i64: 8, 1>}, {transform_indices = @transform_2, window_bounds = array<i64: 1, 8, 128>}]} {
    %c0 = arith.constant 0 : index
    %c0_0 = arith.constant 0 : index
    %0 = vector.load %arg1[%c0, %c0_0] : memref<8x32xf32, #tpu.memory_space<vmem>>, vector<8x32xf32>
    %c0_1 = arith.constant 0 : index
    %c0_2 = arith.constant 0 : index
    %1 = vector.load %arg2[%c0_1, %c0_2] : memref<8x1xi32, #tpu.memory_space<vmem>>, vector<8x1xi32>
    %2 = tpu.iota {dimensions = array<i32: 1>} : vector<8x32xi32>
    %3 = vector.broadcast %1 : vector<8x1xi32> to vector<8x32xi32>
    %4 = arith.cmpi eq, %2, %3 : vector<8x32xi32>
    %cst = arith.constant 0.000000e+00 : f32
    %5 = vector.broadcast %cst : f32 to vector<8x32xf32>
    %6 = arith.select %4, %0, %5 : vector<8x32xi1>, vector<8x32xf32>
    %cst_3 = arith.constant dense<0.000000e+00> : vector<8xf32>
    %7 = vector.multi_reduction <add>, %6, %cst_3 [1] : vector<8x32xf32> to vector<8xf32>
    %8 = vector.shape_cast %7 : vector<8xf32> to vector<8x1xf32>
    %cst_4 = arith.constant dense<0xFF800000> : vector<8xf32>
    %9 = vector.multi_reduction <maximumf>, %0, %cst_4 [1] : vector<8x32xf32> to vector<8xf32>
    %10 = vector.shape_cast %9 : vector<8xf32> to vector<8x1xf32>
    %11 = vector.broadcast %10 : vector<8x1xf32> to vector<8x32xf32>
    %12 = arith.subf %0, %11 : vector<8x32xf32>
    %13 = math.exp %12 : vector<8x32xf32>
    %cst_5 = arith.constant dense<0.000000e+00> : vector<8xf32>
    %14 = vector.multi_reduction <add>, %13, %cst_5 [1] : vector<8x32xf32> to vector<8xf32>
    %15 = vector.shape_cast %14 : vector<8xf32> to vector<8x1xf32>
    %16 = math.log %15 : vector<8x1xf32>
    %17 = arith.addf %16, %10 : vector<8x1xf32>
    %18 = arith.subf %17, %8 : vector<8x1xf32>
    %19 = tpu.iota {dimensions = array<i32: 0>} : vector<8x1xi32>
    %c8_i32 = arith.constant 8 : i32
    %20 = arith.muli %arg0, %c8_i32 : i32
    %21 = vector.broadcast %20 : i32 to vector<8x1xi32>
    %22 = arith.addi %19, %21 : vector<8x1xi32>
    %c8_i32_6 = arith.constant 8 : i32
    %23 = vector.broadcast %c8_i32_6 : i32 to vector<8x1xi32>
    %24 = arith.cmpi slt, %22, %23 : vector<8x1xi32>
    %cst_7 = arith.constant 0.000000e+00 : f32
    %25 = vector.broadcast %cst_7 : f32 to vector<8x1xf32>
    %26 = arith.select %24, %18, %25 : vector<8x1xi1>, vector<8x1xf32>
    %27 = vector.shape_cast %26 : vector<8x1xf32> to vector<1x8x1xf32>
    %cst_8 = arith.constant dense<0.000000e+00> : vector<1xf32>
    %28 = vector.multi_reduction <add>, %27, %cst_8 [1, 2] : vector<1x8x1xf32> to vector<1xf32>
    %29 = vector.shape_cast %28 : vector<1xf32> to vector<1x1x1xf32>
    %30 = vector.extract %29[0, 0, 0] : f32 from vector<1x1x1xf32>
    %31 = vector.broadcast %30 : f32 to vector<1x8x128xf32>
    %c0_9 = arith.constant 0 : index
    %c0_10 = arith.constant 0 : index
    %c0_11 = arith.constant 0 : index
    %32 = vector.load %arg3[%c0_9, %c0_10, %c0_11] : memref<1x8x128xf32, #tpu.memory_space<vmem>>, vector<1x8x128xf32>
    tpu.vector_store %arg3[%c0_9, %c0_10, %c0_11], %31 {strides = array<i32>} : memref<1x8x128xf32, #tpu.memory_space<vmem>>, vector<1x8x128xf32>,
    return
  }
  func.func @transform_0(%arg0: i32) -> (i32, i32) {
    %c0_i32 = arith.constant 0 : i32
    %c0_i32_0 = arith.constant 0 : i32
    return %arg0, %c0_i32 : i32, i32
  }
  func.func @transform_1(%arg0: i32) -> (i32, i32) {
    %c0_i32 = arith.constant 0 : i32
    %c0_i32_0 = arith.constant 0 : i32
    return %arg0, %c0_i32 : i32, i32
  }
  func.func @transform_2(%arg0: i32) -> (i32, i32, i32) {
    %c0_i32 = arith.constant 0 : i32
    %c0_i32_0 = arith.constant 0 : i32
    %c0_i32_1 = arith.constant 0 : i32
    return %arg0, %c0_i32, %c0_i32_0 : i32, i32, i32
  }
}

</mosaic_0001>

<llo_original>
// kernel: tpu_custom_call.1
$region0: #{tpu_custom_call.1}
  #allocation0 [shape = 'u32[]', space=smem, size = 0x4, offset = 0x4, fixed_abs, tag = 'smem constant byte address 0x4 - core index']
  #allocation1 [shape = 'u32[144,128]{1,0:T(1,128)}', space=vmem, size = 0x12000, scoped, tag = 'internal scratch']
  %s0 = inlined_call_operand.vmem [shape: f32[8,32], index: 0, kind: input, shape index: {}]
  %s1 = inlined_call_operand.vmem [shape: s32[8,1], index: 1, kind: input, shape index: {}]
  %s2 = inlined_call_operand.hbm [shape: f32[1,8,128], index: 2, kind: output, shape index: {}]
  %s3 = sld [smem:[#allocation0]]
  $region18: #{tpu_custom_call.1} parent=0
    _
  %s5 = ssub.s32 1, %s3
  %s6 = scalar_select 0, %s5, %s3
  $region1: #{tpu_custom_call.1} parent=0
    #allocation2 [shape = 'u8[4096]{0}', space=vmem, size = 0x1000, scoped, tag = 'output window, operand 0, single buffered']
    #allocation3 [shape = 's32[1]{0}', space=sflag, size = 0x4, scoped, tag = 'scoped memory for tpu_custom_call.1']
    %7 = vsyncpa [#allocation3], 0
    // Predicated region
    $region2: #{tpu_custom_call.1} parent=1 // pred_check
      _
    $region3: #{tpu_custom_call.1} parent=1 // pred_check_branch
      %9 = sbr.rel (0) target = $region5
    $region4: #{tpu_custom_call.1} parent=1 // pred_region
      _
    $region5: #{tpu_custom_call.1} parent=1 // pred_fallthru
      _
    // Predicated region
    $region6: #{tpu_custom_call.1} parent=1 // pred_check
      _
    $region7: #{tpu_custom_call.1} parent=1 // pred_check_branch
      %11 = sbr.rel (0) target = $region9
    $region8: #{tpu_custom_call.1} parent=1 // pred_region
      _
    $region9: #{tpu_custom_call.1} parent=1 // pred_fallthru
      _
    %v12 = vld [vmem:[%s0] sm:$0xff]
    %v13 = vld [vmem:[%s1] sm:$0xff]
    %v14 = vlaneseq
    %v15 = vand.u32 %v14, 127
    %16 = vset.pattern.permute.xlu0 0
    %17 = vperm.xlu0 %16, %v13
    %v18 = vpop.permute.xlu0 %17
    %vm19 = vcmp.eq.s32.totalorder %v15, %v18
    %v20 = vsel %vm19, %v12, 0.0
    %vm21 = vcmask 261120
    %v22 = vsel %vm21, %v20, 0.0
    %23 = vadd.xlane.f32.xlu0 %v22
    %v24 = vpop.xlane.xlu0 %23
    %v25 = vsel %vm21, %v12, -inf
    %26 = vmax.xlane.f32.xlu0 %v25
    %v27 = vpop.xlane.xlu0 %26
    %v28 = vsub.f32 %v12, %v27
    %v29 = vmul.f32 %v28, 1.442695
    %v30 = vpow.pop %v29
    %v31 = vsel %vm21, %v30, 0.0
    %32 = vadd.xlane.f32.xlu0 %v31
    %v33 = vpop.xlane.xlu0 %32
    %v34 = vlog2.pop %v33
    %v35 = vmul.f32 %v34, 0.6931472
    %v36 = vadd.f32 %v35, %v27
    %v37 = vsub.f32 %v36, %v24
    %v38 = vlaneseq
    %v39 = vshrl.u32 %v38, 7
    %s40 = smul.u32 0, 8
    %v41 = vstv %s40
    %v42 = vadd.s32 %v39, %v41
    %vm43 = vcmp.lt.s32.totalorder %v42, 8
    %v44 = vsel %vm43, %v37, 0.0
    %vm45 = vcmask 7168
    %v46 = vsel %vm45, %v44, 0.0
    %47 = vadd.xlane.f32.xlu0 %v46
    %v48 = vpop.xlane.xlu0 %47
    %v49 = vrot.slane %v48, 4
    %v50 = vadd.f32 %v48, %v49
    %v51 = vrot.slane %v50, 2
    %v52 = vadd.f32 %v50, %v51
    %v53 = vrot.slane %v52, 1
    %v54 = vadd.f32 %v52, %v53
    %s55 = vtos %v54
    %v56 = vstv %s55
    %57 = vst [vmem:[#allocation2] sm:$0xff] %v56
    // Predicated region
    $region10: #{tpu_custom_call.1} parent=1 // pred_check
      _
    $region11: #{tpu_custom_call.1} parent=1 // pred_check_branch
      %59 = sbr.rel (0) target = $region13
    $region12: #{tpu_custom_call.1} parent=1 // pred_region
      %s61 = ssub.s32 128, 128
      %62 = vsyncadd [#allocation3], %s61
      %s64 = sshll.u32 [#allocation2], 4
      %s65 = int_to_ptr.vmem [resolvable:$true] %s64
      %67 = dma.vmem_to_hbm [thread:$0]  %s65, 128, %s2, [#allocation3]
    $region13: #{tpu_custom_call.1} parent=1 // pred_fallthru
      _
    // Predicated region
    $region14: #{tpu_custom_call.1} parent=1 // pred_check
      _
    $region15: #{tpu_custom_call.1} parent=1 // pred_check_branch
      %69 = sbr.rel (0) target = $region17
    $region16: #{tpu_custom_call.1} parent=1 // pred_region
      %70 = dma.done [#allocation3], 128
    $region17: #{tpu_custom_call.1} parent=1 // pred_fallthru
      _
    %71 = vsyncpa [#allocation3], 1

</llo_original>
